<compile_context>
chip_gen: v7x
topology: tpu7x:2x2x1
jax: 0.10.0
libtpu: 0.0.40
codegen_flags: <defaults>
</compile_context>

<pallas_src>
import jax
import jax.numpy as jnp
from jax.experimental import pallas as pl
from jax.experimental.pallas import tpu as pltpu

H1, H2 = 10, 20
H1P = 16  # hidden1 padded to a sublane-friendly size (f32 sublane = 8)


def mlp_kernel(xT_ref, w1T_ref, b1_ref, w2T_ref, b2_ref, w3_ref, b3_ref, o_ref):
    # Activations are transposed: (features, batch_tile); batch rides the lanes.
    xT = xT_ref[...]                                                  # (1, TB)

    # fc1: in_features == 1 -> pure VPU broadcast multiply (no MXU).
    h1 = jnp.tanh(w1T_ref[...] * xT + b1_ref[...])                    # (H1P, TB)

    # fc2: the only real matmul; contraction dim padded 10 -> 16 (aligned tile).
    h2 = jnp.dot(w2T_ref[...], h1, preferred_element_type=jnp.float32)
    h2 = jnp.tanh(h2 + b2_ref[...])                                   # (H2, TB)

    # fc3: out_features == 1 -> elementwise multiply + sublane reduction.
    h3 = jnp.sum(w3_ref[...] * h2, axis=0, keepdims=True) + b3_ref[...]  # (1, TB)

    o_ref[...] = jnp.tanh(h3).astype(o_ref.dtype)


def _round_up(n, m):
    return (n + m - 1) // m * m


def mlp_forward(x, params, *, max_tile=512):
    """x: (B, 1) f32; params stored torch-style as (in, out) weights. Returns (B, 1)."""
    w1, b1, w2, b2, w3, b3 = params
    B = x.shape[0]

    # Lane-dense batch tile: multiple of 128, capped at max_tile.
    tb = min(max_tile, _round_up(max(B, 1), 128))
    B_pad = _round_up(B, tb)
    grid = (B_pad // tb,)

    # Transposed / padded operands (prepared once, outside the kernel).
    xT = jnp.zeros((1, B_pad), x.dtype).at[0, :B].set(x[:, 0])

    w1T = jnp.zeros((H1P, 1), jnp.float32).at[:H1, 0].set(w1[0, :])   # (16, 1)
    b1c = jnp.zeros((H1P, 1), jnp.float32).at[:H1, 0].set(b1)         # (16, 1)
    w2T = jnp.zeros((H2, H1P), jnp.float32).at[:, :H1].set(w2.T)      # (20, 16)
    b2c = b2.reshape(H2, 1)                                           # (20, 1)
    w3c = w3.reshape(H2, 1)                                           # (20, 1)
    b3c = b3.reshape(1, 1)                                            # (1, 1)

    # Weights/biases: full-array blocks, constant index_map -> resident in VMEM.
    def resident(a):
        return pl.BlockSpec(a.shape, lambda i: (0, 0))

    outT = pl.pallas_call(
        mlp_kernel,
        out_shape=jax.ShapeDtypeStruct((1, B_pad), x.dtype),
        grid=grid,
        in_specs=[pl.BlockSpec((1, tb), lambda i: (0, i)),
                  resident(w1T), resident(b1c), resident(w2T),
                  resident(b2c), resident(w3c), resident(b3c)],
        out_specs=pl.BlockSpec((1, tb), lambda i: (0, i)),
        compiler_params=pltpu.CompilerParams(
            dimension_semantics=("parallel",)),
    )(xT, w1T, b1c, w2T, b2c, w3c, b3c)

    return outT[0, :B].reshape(B, 1)


def init_params(key):
    # Mimics nn.Linear's uniform(-1/sqrt(fan_in), 1/sqrt(fan_in)); weights kept
    # as (in, out) so the reference computes x @ W + b.
    ks = jax.random.split(key, 6)

    def uniform(k, shape, fan_in):
        bound = 1.0 / jnp.sqrt(jnp.float32(fan_in))
        return jax.random.uniform(k, shape, jnp.float32, -bound, bound)

    w1 = uniform(ks[0], (1, H1), 1)
    b1 = uniform(ks[1], (H1,), 1)
    w2 = uniform(ks[2], (H1, H2), H1)
    b2 = uniform(ks[3], (H2,), H1)
    w3 = uniform(ks[4], (H2, 1), H2)
    b3 = uniform(ks[5], (1,), H2)
    return (w1, b1, w2, b2, w3, b3)


def reference_forward(x, params):
    w1, b1, w2, b2, w3, b3 = params
    h = jnp.tanh(x @ w1 + b1)
    h = jnp.tanh(h @ w2 + b2)
    h = jnp.tanh(h @ w3 + b3)
    return h


if __name__ == "__main__":
    key = jax.random.PRNGKey(0)
    pkey, xkey, xkey2 = jax.random.split(key, 3)
    params = init_params(pkey)

    # Small batch (module's natural size). NOTE: at B=8 plain jnp
    # (reference_forward) is faster than any kernel -- pallas_call dispatch
    # overhead dwarfs ~600 FLOPs. It is run here only to validate the kernel;
    # the large-batch case below is the regime the kernel is built for.
    x_small = jax.random.normal(xkey, (8, 1), jnp.float32)
    out_small = jax.block_until_ready(mlp_forward(x_small, params))
    ref_small = reference_forward(x_small, params)
    assert out_small.shape == (8, 1), out_small.shape
    assert jnp.allclose(out_small, ref_small, atol=1e-5, rtol=1e-5)

    # Larger batch exercising the lane-tiled grid (tiles of 512 + pad/slice).
    x_big = jax.random.normal(xkey2, (600, 1), jnp.float32)
    out_big = jax.block_until_ready(mlp_forward(x_big, params))
    ref_big = reference_forward(x_big, params)
    assert out_big.shape == (600, 1), out_big.shape
    assert jnp.allclose(out_big, ref_big, atol=1e-5, rtol=1e-5)

    print("KERNEL_OK")
</pallas_src>

<mosaic_0001>
module attributes {stable_mosaic.version = 11 : i64} {
  func.func @mlp_kernel(%arg0: i32, %arg1: memref<1x128xf32, #tpu.memory_space<vmem>>, %arg2: memref<16x1xf32, #tpu.memory_space<vmem>>, %arg3: memref<16x1xf32, #tpu.memory_space<vmem>>, %arg4: memref<20x16xf32, #tpu.memory_space<vmem>>, %arg5: memref<20x1xf32, #tpu.memory_space<vmem>>, %arg6: memref<20x1xf32, #tpu.memory_space<vmem>>, %arg7: memref<1x1xf32, #tpu.memory_space<vmem>>, %arg8: memref<1x128xf32, #tpu.memory_space<vmem>>) attributes {dimension_semantics = [#tpu.dimension_semantics<parallel>], iteration_bounds = array<i64: 1>, scalar_prefetch = 0 : i64, scratch_operands = 0 : i64, tpu.core_type = #tpu.core_type<tc>, window_params = [{transform_indices = @transform_0, window_bounds = array<i64: 1, 128>}, {pipeline_mode = #tpu.pipeline_mode<synchronous>, transform_indices = @transform_1, window_bounds = array<i64: 16, 1>}, {pipeline_mode = #tpu.pipeline_mode<synchronous>, transform_indices = @transform_2, window_bounds = array<i64: 16, 1>}, {pipeline_mode = #tpu.pipeline_mode<synchronous>, transform_indices = @transform_3, window_bounds = array<i64: 20, 16>}, {pipeline_mode = #tpu.pipeline_mode<synchronous>, transform_indices = @transform_4, window_bounds = array<i64: 20, 1>}, {pipeline_mode = #tpu.pipeline_mode<synchronous>, transform_indices = @transform_5, window_bounds = array<i64: 20, 1>}, {pipeline_mode = #tpu.pipeline_mode<synchronous>, transform_indices = @transform_6, window_bounds = array<i64: 1, 1>}, {transform_indices = @transform_7, window_bounds = array<i64: 1, 128>}]} {
    %c0 = arith.constant 0 : index
    %c0_0 = arith.constant 0 : index
    %0 = vector.load %arg1[%c0, %c0_0] : memref<1x128xf32, #tpu.memory_space<vmem>>, vector<1x128xf32>
    %c0_1 = arith.constant 0 : index
    %c0_2 = arith.constant 0 : index
    %1 = vector.load %arg2[%c0_1, %c0_2] : memref<16x1xf32, #tpu.memory_space<vmem>>, vector<16x1xf32>
    %2 = vector.broadcast %1 : vector<16x1xf32> to vector<16x128xf32>
    %3 = vector.broadcast %0 : vector<1x128xf32> to vector<16x128xf32>
    %4 = arith.mulf %2, %3 : vector<16x128xf32>
    %c0_3 = arith.constant 0 : index
    %c0_4 = arith.constant 0 : index
    %5 = vector.load %arg3[%c0_3, %c0_4] : memref<16x1xf32, #tpu.memory_space<vmem>>, vector<16x1xf32>
    %6 = vector.broadcast %5 : vector<16x1xf32> to vector<16x128xf32>
    %7 = arith.addf %4, %6 : vector<16x128xf32>
    %8 = math.tanh %7 : vector<16x128xf32>
    %c0_5 = arith.constant 0 : index
    %c0_6 = arith.constant 0 : index
    %9 = vector.load %arg4[%c0_5, %c0_6] : memref<20x16xf32, #tpu.memory_space<vmem>>, vector<20x16xf32>
    %cst = arith.constant dense<0.000000e+00> : vector<20x128xf32>
    %10 = tpu.matmul %9, %8, %cst {dimension_numbers = #tpu.dot_dimension_numbers<[1], [0], [0], [1], [0, 0, 1, 1], [], []>} : vector<20x16xf32>, vector<16x128xf32>, vector<20x128xf32> -> vector<20x128xf32>
    %c0_7 = arith.constant 0 : index
    %c0_8 = arith.constant 0 : index
    %11 = vector.load %arg5[%c0_7, %c0_8] : memref<20x1xf32, #tpu.memory_space<vmem>>, vector<20x1xf32>
    %12 = vector.broadcast %11 : vector<20x1xf32> to vector<20x128xf32>
    %13 = arith.addf %10, %12 : vector<20x128xf32>
    %14 = math.tanh %13 : vector<20x128xf32>
    %c0_9 = arith.constant 0 : index
    %c0_10 = arith.constant 0 : index
    %15 = vector.load %arg6[%c0_9, %c0_10] : memref<20x1xf32, #tpu.memory_space<vmem>>, vector<20x1xf32>
    %16 = vector.broadcast %15 : vector<20x1xf32> to vector<20x128xf32>
    %17 = arith.mulf %16, %14 : vector<20x128xf32>
    %cst_11 = arith.constant dense<0.000000e+00> : vector<128xf32>
    %18 = vector.multi_reduction <add>, %17, %cst_11 [0] : vector<20x128xf32> to vector<128xf32>
    %19 = vector.shape_cast %18 : vector<128xf32> to vector<1x128xf32>
    %c0_12 = arith.constant 0 : index
    %c0_13 = arith.constant 0 : index
    %20 = vector.load %arg7[%c0_12, %c0_13] : memref<1x1xf32, #tpu.memory_space<vmem>>, vector<1x1xf32>
    %21 = vector.broadcast %20 : vector<1x1xf32> to vector<1x128xf32>
    %22 = arith.addf %19, %21 : vector<1x128xf32>
    %23 = math.tanh %22 : vector<1x128xf32>
    %c0_14 = arith.constant 0 : index
    %c0_15 = arith.constant 0 : index
    %24 = vector.load %arg8[%c0_14, %c0_15] : memref<1x128xf32, #tpu.memory_space<vmem>>, vector<1x128xf32>
    tpu.vector_store %arg8[%c0_14, %c0_15], %23 {strides = array<i32>} : memref<1x128xf32, #tpu.memory_space<vmem>>, vector<1x128xf32>,
    return
  }
  func.func @transform_0(%arg0: i32) -> (i32, i32) {
    %c0_i32 = arith.constant 0 : i32
    %c0_i32_0 = arith.constant 0 : i32
    return %c0_i32, %arg0 : i32, i32
  }
  func.func @transform_1(%arg0: i32) -> (i32, i32) {
    %c0_i32 = arith.constant 0 : i32
    %c0_i32_0 = arith.constant 0 : i32
    %c0_i32_1 = arith.constant 0 : i32
    return %c0_i32, %c0_i32_0 : i32, i32
  }
  func.func @transform_2(%arg0: i32) -> (i32, i32) {
    %c0_i32 = arith.constant 0 : i32
    %c0_i32_0 = arith.constant 0 : i32
    %c0_i32_1 = arith.constant 0 : i32
    return %c0_i32, %c0_i32_0 : i32, i32
  }
  func.func @transform_3(%arg0: i32) -> (i32, i32) {
    %c0_i32 = arith.constant 0 : i32
    %c0_i32_0 = arith.constant 0 : i32
    %c0_i32_1 = arith.constant 0 : i32
    return %c0_i32, %c0_i32_0 : i32, i32
  }
  func.func @transform_4(%arg0: i32) -> (i32, i32) {
    %c0_i32 = arith.constant 0 : i32
    %c0_i32_0 = arith.constant 0 : i32
    %c0_i32_1 = arith.constant 0 : i32
    return %c0_i32, %c0_i32_0 : i32, i32
  }
  func.func @transform_5(%arg0: i32) -> (i32, i32) {
    %c0_i32 = arith.constant 0 : i32
    %c0_i32_0 = arith.constant 0 : i32
    %c0_i32_1 = arith.constant 0 : i32
    return %c0_i32, %c0_i32_0 : i32, i32
  }
  func.func @transform_6(%arg0: i32) -> (i32, i32) {
    %c0_i32 = arith.constant 0 : i32
    %c0_i32_0 = arith.constant 0 : i32
    %c0_i32_1 = arith.constant 0 : i32
    return %c0_i32, %c0_i32_0 : i32, i32
  }
  func.func @transform_7(%arg0: i32) -> (i32, i32) {
    %c0_i32 = arith.constant 0 : i32
    %c0_i32_0 = arith.constant 0 : i32
    return %c0_i32, %arg0 : i32, i32
  }
}

</mosaic_0001>

<llo_original>
// kernel: tpu_custom_call.1
$region0: #{tpu_custom_call.1}
  #allocation0 [shape = 'u32[]', space=smem, size = 0x4, offset = 0x4, fixed_abs, tag = 'smem constant byte address 0x4 - core index']
  #allocation1 [shape = 'u32[144,128]{1,0:T(1,128)}', space=vmem, size = 0x12000, scoped, tag = 'internal scratch']
  #allocation2 [shape = 'f32[1,1]{1,0:T(1,128)S(1)}', space=vmem, size = 0x200, scoped, tag = 'scoped memory for tpu_custom_call.1']
  %s0 = inlined_call_operand.vmem [shape: f32[1,128], index: 0, kind: input, shape index: {}]
  %s1 = inlined_call_operand.vmem [shape: f32[16,1], index: 1, kind: input, shape index: {}]
  %s2 = inlined_call_operand.vmem [shape: f32[16,1], index: 2, kind: input, shape index: {}]
  %s3 = inlined_call_operand.vmem [shape: f32[20,16], index: 3, kind: input, shape index: {}]
  %s4 = inlined_call_operand.vmem [shape: f32[20,1], index: 4, kind: input, shape index: {}]
  %s5 = inlined_call_operand.vmem [shape: f32[20,1], index: 5, kind: input, shape index: {}]
  %s6 = inlined_call_operand.<no memory space> [shape: f32[1,1], index: 6, kind: input, shape index: {}]
  %s7 = inlined_call_operand.hbm [shape: f32[1,128], index: 7, kind: output, shape index: {}]
  %s8 = sld [smem:[#allocation0]]
  $region38: #{tpu_custom_call.1} parent=0
    _
  %s10 = ssub.s32 1, %s8
  %s11 = scalar_select 0, %s10, %s8
  %v12 = vstv %s6
  %13 = vst [vmem:[#allocation2] sm:$0x1] %v12
  $region1: #{tpu_custom_call.1} parent=0
    #allocation3 [shape = 'u8[512]{0}', space=vmem, size = 0x400, scoped, tag = 'output window, operand 0, single buffered']
    #allocation4 [shape = 's32[1]{0}', space=sflag, size = 0x4, scoped, tag = 'scoped memory for tpu_custom_call.1']
    %14 = vsyncpa [#allocation4], 0
    // Predicated region
    $region2: #{tpu_custom_call.1} parent=1 // pred_check
      _
    $region3: #{tpu_custom_call.1} parent=1 // pred_check_branch
      %16 = sbr.rel (0) target = $region5
    $region4: #{tpu_custom_call.1} parent=1 // pred_region
      _
    $region5: #{tpu_custom_call.1} parent=1 // pred_fallthru
      _
    // Predicated region
    $region6: #{tpu_custom_call.1} parent=1 // pred_check
      _
    $region7: #{tpu_custom_call.1} parent=1 // pred_check_branch
      %18 = sbr.rel (0) target = $region9
    $region8: #{tpu_custom_call.1} parent=1 // pred_region
      _
    $region9: #{tpu_custom_call.1} parent=1 // pred_fallthru
      _
    // Predicated region
    $region10: #{tpu_custom_call.1} parent=1 // pred_check
      _
    $region11: #{tpu_custom_call.1} parent=1 // pred_check_branch
      %20 = sbr.rel (0) target = $region13
    $region12: #{tpu_custom_call.1} parent=1 // pred_region
      _
    $region13: #{tpu_custom_call.1} parent=1 // pred_fallthru
      _
    // Predicated region
    $region14: #{tpu_custom_call.1} parent=1 // pred_check
      _
    $region15: #{tpu_custom_call.1} parent=1 // pred_check_branch
      %22 = sbr.rel (0) target = $region17
    $region16: #{tpu_custom_call.1} parent=1 // pred_region
      _
    $region17: #{tpu_custom_call.1} parent=1 // pred_fallthru
      _
    // Predicated region
    $region18: #{tpu_custom_call.1} parent=1 // pred_check
      _
    $region19: #{tpu_custom_call.1} parent=1 // pred_check_branch
      %24 = sbr.rel (0) target = $region21
    $region20: #{tpu_custom_call.1} parent=1 // pred_region
      _
    $region21: #{tpu_custom_call.1} parent=1 // pred_fallthru
      _
    // Predicated region
    $region22: #{tpu_custom_call.1} parent=1 // pred_check
      _
    $region23: #{tpu_custom_call.1} parent=1 // pred_check_branch
      %26 = sbr.rel (0) target = $region25
    $region24: #{tpu_custom_call.1} parent=1 // pred_region
      _
    $region25: #{tpu_custom_call.1} parent=1 // pred_fallthru
      _
    // Predicated region
    $region26: #{tpu_custom_call.1} parent=1 // pred_check
      _
    $region27: #{tpu_custom_call.1} parent=1 // pred_check_branch
      %28 = sbr.rel (0) target = $region29
    $region28: #{tpu_custom_call.1} parent=1 // pred_region
      _
    $region29: #{tpu_custom_call.1} parent=1 // pred_fallthru
      _
    %v29 = vld [vmem:[%s0] sm:$0x1]
    %v30 = vld [vmem:[%s1] sm:$0xff]
    %v31 = vld [vmem:[%s1 + $0x8] sm:$0xff]
    %33 = vset.pattern.permute.xlu0 0
    %34 = vperm.xlu0 %33, %v30
    %v35 = vpop.permute.xlu0 %34
    %38 = vset.pattern.permute.xlu0 0
    %39 = vperm.xlu0 %38, %v31
    %v40 = vpop.permute.xlu0 %39
    %v43 = vlaneseq
    %v44 = vshrl.u32 %v43, 7
    %v45 = vsub.s32 0, %v44
    %v46 = vrot.slane %v29, %v45
    %v48 = vmul.f32 %v35, %v46
    %v49 = vmul.f32 %v40, %v46
    %v50 = vld [vmem:[%s2] sm:$0xff]
    %v51 = vld [vmem:[%s2 + $0x8] sm:$0xff]
    %53 = vset.pattern.permute.xlu0 0
    %54 = vperm.xlu0 %53, %v50
    %v55 = vpop.permute.xlu0 %54
    %58 = vset.pattern.permute.xlu0 0
    %59 = vperm.xlu0 %58, %v51
    %v60 = vpop.permute.xlu0 %59
    %v62 = vadd.f32 %v48, %v55
    %v63 = vadd.f32 %v49, %v60
    %v64 = vtanh.pop %v62
    %v65 = vtanh.pop %v63
    %v66 = vld [vmem:[%s3] sm:$0xff]
    %v67 = vld [vmem:[%s3 + $0x8] sm:$0xff]
    %v68 = vld [vmem:[%s3 + $0x10] sm:$0xf]
    %v69 = vld [vmem:[%s4] sm:$0xff]
    %v70 = vld [vmem:[%s4 + $0x8] sm:$0xff]
    %v71 = vld [vmem:[%s4 + $0x10] sm:$0xf]
    %73 = vset.pattern.permute.xlu0 0
    %74 = vperm.xlu0 %73, %v69
    %v75 = vpop.permute.xlu0 %74
    %78 = vset.pattern.permute.xlu0 0
    %79 = vperm.xlu0 %78, %v70
    %v80 = vpop.permute.xlu0 %79
    %83 = vset.pattern.permute.xlu0 0
    %84 = vperm.xlu0 %83, %v71
    %v85 = vpop.permute.xlu0 %84
    %vm87 = vcmask 130048
    %v89 = vsel %vm87, %v66, 0
    %v92 = vsel %vm87, %v67, 0
    %v95 = vsel %vm87, %v68, 0
    %97 = vmatprep.subr.mxu0 0.0
    %98 = vmatpush1.msra.mxu0 %v64
    %99 = vmatprep.subr.mxu0 0.0
    %100 = vmatpush1.msra.mxu0 %v65
    %101 = vmatprep.subr.mxu0 0.0
    %102 = vmatpush1.msra.mxu0 0.0
    %103 = vmatprep.subr.mxu0 0.0
    %104 = vmatpush1.msra.mxu0 0.0
    %105 = vmatprep.subr.mxu0 0.0
    %106 = vmatpush1.msra.mxu0 0.0
    %107 = vmatprep.subr.mxu0 0.0
    %108 = vmatpush1.msra.mxu0 0.0
    %109 = vmatprep.subr.mxu0 0.0
    %110 = vmatpush1.msra.mxu0 0.0
    %111 = vmatprep.subr.mxu0 0.0
    %112 = vmatpush1.msra.mxu0 0.0
    %113 = vmatprep.subr.mxu0 0.0
    %114 = vmatpush1.msra.mxu0 0.0
    %115 = vmatprep.subr.mxu0 0.0
    %116 = vmatpush1.msra.mxu0 0.0
    %117 = vmatprep.subr.mxu0 0.0
    %118 = vmatpush1.msra.mxu0 0.0
    %119 = vmatprep.subr.mxu0 0.0
    %120 = vmatpush1.msra.mxu0 0.0
    %121 = vmatprep.subr.mxu0 0.0
    %122 = vmatpush1.msra.mxu0 0.0
    %123 = vmatprep.subr.mxu0 0.0
    %124 = vmatpush1.msra.mxu0 0.0
    %125 = vmatprep.subr.mxu0 0.0
    %126 = vmatpush1.msra.mxu0 0.0
    %127 = vmatprep.subr.mxu0 0.0
    %128 = vmatpush1.msra.mxu0 0.0
    %129 = vmatprep.subr.mxu0 0.0
    %130 = vmatpush1.msra.mxu0 0.0
    %131 = vmatprep.subr.mxu0 0.0
    %132 = vmatpush1.msra.mxu0 0.0
    %133 = vmatprep.subr.mxu0 0.0
    %134 = vmatpush1.msra.mxu0 0.0
    %135 = vmatprep.subr.mxu0 0.0
    %136 = vmatpush1.msra.mxu0 0.0
    %137 = vmatprep.subr.mxu0 0.0
    %138 = vmatpush1.msra.mxu0 0.0
    %139 = vmatprep.subr.mxu0 0.0
    %140 = vmatpush1.msra.mxu0 0.0
    %141 = vmatprep.subr.mxu0 0.0
    %142 = vmatpush1.msra.mxu0 0.0
    %143 = vmatprep.subr.mxu0 0.0
    %144 = vmatpush1.msra.mxu0 0.0
    %145 = vmatprep.subr.mxu0 0.0
    %146 = vmatpush1.msra.mxu0 0.0
    %147 = vmatprep.subr.mxu0 0.0
    %148 = vmatpush1.msra.mxu0 0.0
    %149 = vmatprep.subr.mxu0 0.0
    %150 = vmatpush1.msra.mxu0 0.0
    %151 = vmatprep.subr.mxu0 0.0
    %152 = vmatpush1.msra.mxu0 0.0
    %153 = vmatprep.subr.mxu0 0.0
    %154 = vmatpush1.msra.mxu0 0.0
    %155 = vmatprep.subr.mxu0 0.0
    %156 = vmatpush1.msra.mxu0 0.0
    %157 = vmatprep.subr.mxu0 0.0
    %158 = vmatpush1.msra.mxu0 0.0
    %159 = vmatprep.subr.mxu0 0.0
    %160 = vmatpush1.msra.mxu0 0.0
    %161 = vmatprep.mubr.f32.mxu0 0.0
    %162 = vmatmul.mubr.f32.gmra.mrb[0].mxu0 %v89
    %v163 = vpop.f32.mrb[0].mxu0
    %v164 = vadd.f32 %v75, %v163
    %v165 = vpop.f32.mrb[0].mxu0
    %166 = vmatprep.mubr.f32.mxu0 0.0
    %167 = vmatmul.mubr.f32.gmra.mrb[0].mxu0 %v92
    %v168 = vpop.f32.mrb[0].mxu0
    %v169 = vadd.f32 %v80, %v168
    %v170 = vpop.f32.mrb[0].mxu0
    %171 = vmatprep.mubr.f32.mxu0 0.0
    %172 = vmatmul.mubr.f32.gmra.mrb[0].mxu0 %v95
    %v173 = vpop.f32.mrb[0].mxu0
    %v174 = vadd.f32 %v85, %v173
    %v175 = vpop.f32.mrb[0].mxu0
    %176 = vdwg.mxu0
    %v177 = vtanh.pop %v164
    %v178 = vtanh.pop %v169
    %v179 = vtanh.pop %v174
    %v180 = vld [vmem:[%s5] sm:$0xff]
    %v181 = vld [vmem:[%s5 + $0x8] sm:$0xff]
    %v182 = vld [vmem:[%s5 + $0x10] sm:$0xf]
    %184 = vset.pattern.permute.xlu0 0
    %185 = vperm.xlu0 %184, %v180
    %v186 = vpop.permute.xlu0 %185
    %189 = vset.pattern.permute.xlu0 0
    %190 = vperm.xlu0 %189, %v181
    %v191 = vpop.permute.xlu0 %190
    %194 = vset.pattern.permute.xlu0 0
    %195 = vperm.xlu0 %194, %v182
    %v196 = vpop.permute.xlu0 %195
    %v198 = vmul.f32 %v186, %v177
    %v199 = vmul.f32 %v191, %v178
    %v200 = vmul.f32 %v196, %v179
    %v201 = vadd.f32 %v198, %v199
    %vm202 = vcmask 1043456
    %v203 = vsel %vm202, %v200, 0.0
    %v204 = vadd.f32 %v201, %v203
    %v205 = vrot.slane %v204, 4
    %v206 = vadd.f32 %v204, %v205
    %v207 = vrot.slane %v206, 2
    %v208 = vadd.f32 %v206, %v207
    %v209 = vrot.slane %v208, 1
    %v210 = vadd.f32 %v208, %v209
    %v211 = vld [vmem:[#allocation2] sm:$0x1]
    %213 = vset.pattern.permute.xlu0 0
    %214 = vperm.xlu0 %213, %v211
    %v215 = vpop.permute.xlu0 %214
    %v217 = vlaneseq
    %v218 = vshrl.u32 %v217, 7
    %v219 = vsub.s32 0, %v218
    %v220 = vrot.slane %v215, %v219
    %v221 = vadd.f32 %v210, %v220
    %v222 = vtanh.pop %v221
    %223 = vst [vmem:[#allocation3] sm:$0x1] %v222
    // Predicated region
    $region30: #{tpu_custom_call.1} parent=1 // pred_check
      _
    $region31: #{tpu_custom_call.1} parent=1 // pred_check_branch
      %225 = sbr.rel (0) target = $region33
    $region32: #{tpu_custom_call.1} parent=1 // pred_region
      %s227 = ssub.s32 16, 16
      %228 = vsyncadd [#allocation4], %s227
      %s230 = sshll.u32 [#allocation3], 4
      %s231 = int_to_ptr.vmem [resolvable:$true] %s230
      %233 = dma.vmem_to_hbm [thread:$0]  %s231, 16, %s7, [#allocation4]
    $region33: #{tpu_custom_call.1} parent=1 // pred_fallthru
      _
    // Predicated region
    $region34: #{tpu_custom_call.1} parent=1 // pred_check
      _
    $region35: #{tpu_custom_call.1} parent=1 // pred_check_branch
      %235 = sbr.rel (0) target = $region37
    $region36: #{tpu_custom_call.1} parent=1 // pred_region
      %236 = dma.done [#allocation4], 16
    $region37: #{tpu_custom_call.1} parent=1 // pred_fallthru
      _
    %237 = vsyncpa [#allocation4], 1

</llo_original>
